<compile_context>
chip_gen: v7x
topology: tpu7x:2x2x1
jax: 0.10.0
libtpu: 0.0.40
codegen_flags: <defaults>
</compile_context>

<pallas_src>
from typing import NamedTuple

import jax
import jax.numpy as jnp
from jax.experimental import pallas as pl
from jax.experimental.pallas import tpu as pltpu


def _round_up(x, m):
    return ((x + m - 1) // m) * m


def _featurizer_kernel(x_ref, w_ref, o_ref):
    # x_ref: [tm, tk]    f32 flattened-image tile (cast to bf16 in-kernel)
    # w_ref: [tk, Dpad]  bf16 projection-weight tile (pre-cast / pre-padded once)
    # o_ref: [tm, Dpad]  f32 output block, K-resident accumulator
    k = pl.program_id(1)

    @pl.when(k == 0)
    def _():
        o_ref[...] = jnp.zeros_like(o_ref)

    # Per-tile bf16 cast (full-rate MXU, f32 accumulation) — no HBM bf16 copy.
    x = x_ref[...].astype(jnp.bfloat16)
    o_ref[...] += jnp.dot(x, w_ref[...], preferred_element_type=jnp.float32)

    @pl.when(k == pl.num_programs(1) - 1)
    def _():
        acc = o_ref[...]
        # F.normalize(x, p=2, dim=-1): x / max(||x||_2, 1e-12)
        #   == x * rsqrt(max(sumsq, 1e-24)); rsqrt runs on the EUP slot.
        sumsq = jnp.sum(acc * acc, axis=-1, keepdims=True)
        o_ref[...] = acc * jax.lax.rsqrt(jnp.maximum(sumsq, 1e-24))


class _Plan(NamedTuple):
    tm: int
    tk: int
    B_pad: int
    K_pad: int
    D_pad: int
    vmem_limit: int


# Per-step VMEM working-set budget: safe on v7x (64 MiB physical, 2nd core +
# compiler scratch headroom); trivially fits v5e/v6e's 128 MiB.
_VMEM_BUDGET = 28 * 1024 * 1024


def _plan(B, K, D):
    D_pad = _round_up(D, 128)

    # Row tile: multiple of 16 (bf16 packs 16 sublanes per vreg; full MXU feed).
    B16 = _round_up(max(B, 1), 16)
    if B16 <= 16:
        tm = B16  # single row tile -> W streamed from HBM exactly once
    else:
        # >= 2 row tiles so both v7x TensorCores get work (megacore), capped so
        # the resident f32 output block stays small.
        tm = min(512, _round_up((B16 + 1) // 2, 16))
    # Keep the resident output block within ~half the budget for very wide D.
    max_tm_for_out = max(16, (_VMEM_BUDGET // (4 * D_pad * 4)) // 16 * 16)
    tm = min(tm, max_tm_for_out)
    B_pad = _round_up(B, tm)

    # Reduction tile: lane-aligned, as large as the budget allows (fewer grid
    # steps; tk == K_pad makes W's block index constant -> fully VMEM-resident).
    K128 = _round_up(K, 128)
    out_bytes = 2 * tm * D_pad * 4                 # resident f32 out (+ spare buffer)
    per_tk = 2 * tm * 4 + 2 * D_pad * 2            # dbl-buffered x (f32) + w (bf16)
    tk_max = max(128, ((_VMEM_BUDGET - out_bytes) // per_tk) // 128 * 128)
    tk = min(K128, tk_max)
    K_pad = _round_up(K, tk)

    working = 2 * (tm * D_pad * 4 + tm * tk * 4 + tk * D_pad * 2)
    vmem_limit = min(60 * 1024 * 1024, max(16 * 1024 * 1024, working + (4 << 20)))
    return _Plan(tm, tk, B_pad, K_pad, D_pad, vmem_limit)


def make_featurizer(weight, batch_size):
    """One-time setup: plan tiles, pre-cast/pad the projection weight (bf16),
    build the pallas_call, and return forward(images_nchw) -> [B, D] f32."""
    K, D = weight.shape
    tm, tk, B_pad, K_pad, D_pad, vmem_limit = _plan(batch_size, K, D)

    # Weight prep happens ONCE, outside the per-call hot path.
    w_padded = weight.astype(jnp.bfloat16)
    if (K_pad, D_pad) != (K, D):
        w_padded = jnp.pad(w_padded, ((0, K_pad - K), (0, D_pad - D)))
    w_padded = jax.block_until_ready(w_padded)

    num_row_tiles = B_pad // tm
    k_steps = K_pad // tk
    # Constant W block index (k_steps == 1) -> W fetched once; otherwise it is
    # re-streamed once per row tile.
    w_reads = 1 if k_steps == 1 else num_row_tiles
    cost = pl.CostEstimate(
        flops=2 * B_pad * K_pad * D_pad,
        transcendentals=B_pad,  # one rsqrt per row
        bytes_accessed=(B_pad * K_pad * 4
                        + w_reads * K_pad * D_pad * 2
                        + B_pad * D_pad * 4),
    )

    call = pl.pallas_call(
        _featurizer_kernel,
        out_shape=jax.ShapeDtypeStruct((B_pad, D_pad), jnp.float32),
        grid_spec=pltpu.PrefetchScalarGridSpec(
            num_scalar_prefetch=0,
            grid=(num_row_tiles, k_steps),
            in_specs=[
                pl.BlockSpec((tm, tk), lambda i, k: (i, k)),
                pl.BlockSpec((tk, D_pad), lambda i, k: (k, 0)),
            ],
            out_specs=pl.BlockSpec((tm, D_pad), lambda i, k: (i, 0)),
        ),
        compiler_params=pltpu.CompilerParams(
            dimension_semantics=("parallel", "arbitrary"),
            vmem_limit_bytes=vmem_limit,
        ),
        cost_estimate=cost,
    )

    @jax.jit
    def _forward(images_nchw, w):
        B = images_nchw.shape[0]
        if B != batch_size:
            raise ValueError(f"batch {B} != planned batch {batch_size}")
        x = images_nchw.reshape(B, K)
        if x.dtype != jnp.float32:
            x = x.astype(jnp.float32)
        if (B_pad, K_pad) != (B, K):
            # Only touches the (small) activation, and only when the tiles do
            # not divide the true shape; the dominant weight stream is never
            # re-padded per call.
            x = jnp.pad(x, ((0, B_pad - B), (0, K_pad - K)))
        out = call(x, w)
        return out[:B, :D]

    # TODO(synk): for tiny batches on v7x (single row tile) one TensorCore is
    # idle; splitting K across the two cores with per-core partial accumulators
    # plus a small combine+normalize pass would recover it.
    return lambda images_nchw: _forward(images_nchw, w_padded)


def _reference(images_nchw, weight):
    B = images_nchw.shape[0]
    x = images_nchw.reshape(B, -1).astype(jnp.float32)
    feats = x @ weight.astype(jnp.float32)
    norm = jnp.sqrt(jnp.sum(feats * feats, axis=-1, keepdims=True))
    return feats / jnp.maximum(norm, 1e-12)


if __name__ == "__main__":
    key = jax.random.PRNGKey(0)
    k_img, k_w = jax.random.split(key)

    B, C, H, W = 2, 4, 16, 16          # small NCHW images
    D = 32                             # feature (embedding) dim
    K = C * H * W

    images = jax.random.normal(k_img, (B, C, H, W), dtype=jnp.float32)
    # Deterministic synthetic encoder weights (stand-in for model.encode_image).
    # TODO(synk): a real CLIP image backbone (conv/ViT encode_image) is outside
    # this kernel's scope; only the projection + L2-normalize hot path is fused.
    weight = jax.random.normal(k_w, (K, D), dtype=jnp.float32) * 0.02

    featurize = make_featurizer(weight, batch_size=B)
    out = jax.block_until_ready(featurize(images))

    ref = _reference(images, weight)
    assert out.shape == (B, D)
    # bf16 operands + f32 accumulation: loosen tolerance vs. the pure-f32 ref.
    assert jnp.allclose(out, ref, atol=2e-2, rtol=2e-2)
    # rows are unit-norm (normalization epilogue is f32)
    assert jnp.allclose(jnp.linalg.norm(out, axis=-1), 1.0, atol=1e-4)

    print("KERNEL_OK")
</pallas_src>

<mosaic_0001>
module attributes {stable_mosaic.version = 11 : i64} {
  func.func @_featurizer_kernel(%arg0: i32, %arg1: i32, %arg2: memref<16x1024xf32, #tpu.memory_space<vmem>>, %arg3: memref<1024x128xbf16, #tpu.memory_space<vmem>>, %arg4: memref<16x128xf32, #tpu.memory_space<vmem>>) attributes {dimension_semantics = [#tpu.dimension_semantics<parallel>, #tpu.dimension_semantics<arbitrary>], iteration_bounds = array<i64: 1, 1>, scalar_prefetch = 0 : i64, scratch_operands = 0 : i64, tpu.core_type = #tpu.core_type<tc>, window_params = [{transform_indices = @transform_0, window_bounds = array<i64: 16, 1024>}, {transform_indices = @transform_1, window_bounds = array<i64: 1024, 128>}, {transform_indices = @transform_2, window_bounds = array<i64: 16, 128>}]} {
    %c0_i32 = arith.constant 0 : i32
    %0 = arith.cmpi eq, %arg1, %c0_i32 : i32
    %1 = arith.extui %0 : i1 to i32
    %c0_i32_0 = arith.constant 0 : i32
    %2 = arith.cmpi ne, %1, %c0_i32_0 : i32
    scf.if %2 {
      %cst_10 = arith.constant 0.000000e+00 : f32
      %13 = vector.broadcast %cst_10 : f32 to vector<16x128xf32>
      %c0_11 = arith.constant 0 : index
      %c0_12 = arith.constant 0 : index
      %14 = vector.load %arg4[%c0_11, %c0_12] : memref<16x128xf32, #tpu.memory_space<vmem>>, vector<16x128xf32>
      tpu.vector_store %arg4[%c0_11, %c0_12], %13 {strides = array<i32>} : memref<16x128xf32, #tpu.memory_space<vmem>>, vector<16x128xf32>,
    } else {
    }
    %c0 = arith.constant 0 : index
    %c0_1 = arith.constant 0 : index
    %3 = vector.load %arg2[%c0, %c0_1] : memref<16x1024xf32, #tpu.memory_space<vmem>>, vector<16x1024xf32>
    %4 = arith.truncf %3 : vector<16x1024xf32> to vector<16x1024xbf16>
    %c0_2 = arith.constant 0 : index
    %c0_3 = arith.constant 0 : index
    %5 = vector.load %arg4[%c0_2, %c0_3] : memref<16x128xf32, #tpu.memory_space<vmem>>, vector<16x128xf32>
    %c0_4 = arith.constant 0 : index
    %c0_5 = arith.constant 0 : index
    %6 = vector.load %arg3[%c0_4, %c0_5] : memref<1024x128xbf16, #tpu.memory_space<vmem>>, vector<1024x128xbf16>
    %cst = arith.constant dense<0.000000e+00> : vector<16x128xf32>
    %7 = tpu.matmul %4, %6, %cst {dimension_numbers = #tpu.dot_dimension_numbers<[1], [0], [0], [1], [0, 0, 1, 1], [], []>} : vector<16x1024xbf16>, vector<1024x128xbf16>, vector<16x128xf32> -> vector<16x128xf32>
    %8 = arith.addf %5, %7 : vector<16x128xf32>
    %c0_6 = arith.constant 0 : index
    %c0_7 = arith.constant 0 : index
    %9 = vector.load %arg4[%c0_6, %c0_7] : memref<16x128xf32, #tpu.memory_space<vmem>>, vector<16x128xf32>
    tpu.vector_store %arg4[%c0_6, %c0_7], %8 {strides = array<i32>} : memref<16x128xf32, #tpu.memory_space<vmem>>, vector<16x128xf32>,
    %c0_i32_8 = arith.constant 0 : i32
    %10 = arith.cmpi eq, %arg1, %c0_i32_8 : i32
    %11 = arith.extui %10 : i1 to i32
    %c0_i32_9 = arith.constant 0 : i32
    %12 = arith.cmpi ne, %11, %c0_i32_9 : i32
    scf.if %12 {
      %c0_10 = arith.constant 0 : index
      %c0_11 = arith.constant 0 : index
      %13 = vector.load %arg4[%c0_10, %c0_11] : memref<16x128xf32, #tpu.memory_space<vmem>>, vector<16x128xf32>
      %14 = arith.mulf %13, %13 : vector<16x128xf32>
      %cst_12 = arith.constant dense<0.000000e+00> : vector<16xf32>
      %15 = vector.multi_reduction <add>, %14, %cst_12 [1] : vector<16x128xf32> to vector<16xf32>
      %16 = vector.shape_cast %15 : vector<16xf32> to vector<16x1xf32>
      %cst_13 = arith.constant 1.000000e-24 : f32
      %17 = vector.broadcast %cst_13 : f32 to vector<16x1xf32>
      %18 = arith.maximumf %16, %17 : vector<16x1xf32>
      %19 = math.rsqrt %18 : vector<16x1xf32>
      %20 = vector.broadcast %19 : vector<16x1xf32> to vector<16x128xf32>
      %21 = arith.mulf %13, %20 : vector<16x128xf32>
      %c0_14 = arith.constant 0 : index
      %c0_15 = arith.constant 0 : index
      %22 = vector.load %arg4[%c0_14, %c0_15] : memref<16x128xf32, #tpu.memory_space<vmem>>, vector<16x128xf32>
      tpu.vector_store %arg4[%c0_14, %c0_15], %21 {strides = array<i32>} : memref<16x128xf32, #tpu.memory_space<vmem>>, vector<16x128xf32>,
    } else {
    }
    return
  }
  func.func @transform_0(%arg0: i32, %arg1: i32) -> (i32, i32) {
    %c0_i32 = arith.constant 0 : i32
    return %arg0, %arg1 : i32, i32
  }
  func.func @transform_1(%arg0: i32, %arg1: i32) -> (i32, i32) {
    %c0_i32 = arith.constant 0 : i32
    %c0_i32_0 = arith.constant 0 : i32
    return %arg1, %c0_i32 : i32, i32
  }
  func.func @transform_2(%arg0: i32, %arg1: i32) -> (i32, i32) {
    %c0_i32 = arith.constant 0 : i32
    %c0_i32_0 = arith.constant 0 : i32
    return %arg0, %c0_i32 : i32, i32
  }
}

</mosaic_0001>

<llo_original>
// kernel: _forward.1
$region0: #{_forward.1}
  #allocation0 [shape = 'u32[]', space=smem, size = 0x4, offset = 0x4, fixed_abs, tag = 'smem constant byte address 0x4 - core index']
  #allocation1 [shape = 'u32[144,128]{1,0:T(1,128)}', space=vmem, size = 0x12000, scoped, tag = 'internal scratch']
  %s0 = inlined_call_operand.vmem [shape: f32[16,1024], index: 0, kind: input, shape index: {}]
  %s1 = inlined_call_operand.hbm [shape: bf16[1024,128], index: 1, kind: input, shape index: {}]
  %s2 = inlined_call_operand.vmem [shape: f32[16,128], index: 2, kind: output, shape index: {}]
  %s3 = sld [smem:[#allocation0]]
  $region30: #{_forward.1} parent=0
    _
  %s5 = ssub.s32 1, %s3
  %s6 = scalar_select 0, %s5, %s3
  $region1: #{_forward.1} parent=0
    #allocation2 [shape = 'u8[262144]{0}', space=vmem, size = 0x40000, scoped, tag = 'input window, operand 1, single buffered']
    #allocation3 [shape = 's32[1]{0}', space=sflag, size = 0x4, scoped, tag = 'scoped memory for _forward.1']
    %7 = vsyncpa [#allocation3], 0
    // Predicated region
    $region2: #{_forward.1} parent=1 // pred_check
      _
    $region3: #{_forward.1} parent=1 // pred_check_branch
      %9 = sbr.rel (0) target = $region5
    $region4: #{_forward.1} parent=1 // pred_region
      _
    $region5: #{_forward.1} parent=1 // pred_fallthru
      _
    // Predicated region
    $region6: #{_forward.1} parent=1 // pred_check
      _
    $region7: #{_forward.1} parent=1 // pred_check_branch
      %11 = sbr.rel (0) target = $region9
    $region8: #{_forward.1} parent=1 // pred_region
      %s13 = ssub.s32 8192, 8192
      %14 = vsyncadd [#allocation3], %s13
      %s15 = sshll.u32 [#allocation2], 4
      %s16 = int_to_ptr.vmem [resolvable:$true] %s15
      %21 = dma.hbm_to_vmem [thread:$0]  %s1, 8192, %s16, [#allocation3], 64, 64, 4
    $region9: #{_forward.1} parent=1 // pred_fallthru
      _
    // Predicated region
    $region10: #{_forward.1} parent=1 // pred_check
      _
    $region11: #{_forward.1} parent=1 // pred_check_branch
      %23 = sbr.rel (0) target = $region13
    $region12: #{_forward.1} parent=1 // pred_region
      %24 = dma.done [#allocation3], 8192
    $region13: #{_forward.1} parent=1 // pred_fallthru
      _
    %p26 = scmp.eq.s32.totalorder 0, 0
    // Predicated region
    $region14: #{_forward.1} parent=1 // pred_check
      %p27 = pneg %p26
    $region15: #{_forward.1} parent=1 // pred_check_branch
      %29 = sbr.rel (%p27) target = $region17
    $region16: #{_forward.1} parent=1 // pred_region
      %30 = vst [vmem:[%s2] sm:$0xff] 0.0
      %31 = vst [vmem:[%s2 + $0x8] sm:$0xff] 0.0
    $region17: #{_forward.1} parent=1 // pred_fallthru
      _
    %v32 = vld [vmem:[%s0] sm:$0xff]
    %v33 = vld [vmem:[%s0 + $0x8] sm:$0xff]
    %v34 = vld [vmem:[%s0 + $0x10] sm:$0xff]
    %v35 = vld [vmem:[%s0 + $0x18] sm:$0xff]
    %v36 = vld [vmem:[%s0 + $0x20] sm:$0xff]
    %v37 = vld [vmem:[%s0 + $0x28] sm:$0xff]
    %v38 = vld [vmem:[%s0 + $0x30] sm:$0xff]
    %v39 = vld [vmem:[%s0 + $0x38] sm:$0xff]
    %v40 = vld [vmem:[%s0 + $0x40] sm:$0xff]
    %v41 = vld [vmem:[%s0 + $0x48] sm:$0xff]
    %v42 = vld [vmem:[%s0 + $0x50] sm:$0xff]
    %v43 = vld [vmem:[%s0 + $0x58] sm:$0xff]
    %v44 = vld [vmem:[%s0 + $0x60] sm:$0xff]
    %v45 = vld [vmem:[%s0 + $0x68] sm:$0xff]
    %v46 = vld [vmem:[%s0 + $0x70] sm:$0xff]
    %v47 = vld [vmem:[%s0 + $0x78] sm:$0xff]
    %v48 = vpack.c.bf16 %v40, %v32
    %v49 = vpack.c.bf16 %v41, %v33
    %v50 = vpack.c.bf16 %v42, %v34
    %v51 = vpack.c.bf16 %v43, %v35
    %v52 = vpack.c.bf16 %v44, %v36
    %v53 = vpack.c.bf16 %v45, %v37
    %v54 = vpack.c.bf16 %v46, %v38
    %v55 = vpack.c.bf16 %v47, %v39
    %v56 = vld [vmem:[%s2] sm:$0xff]
    %v57 = vld [vmem:[%s2 + $0x8] sm:$0xff]
    %v58 = vld [vmem:[#allocation2] sm:$0xf]
    %v59 = vld [vmem:[#allocation2 + $0x4] sm:$0xf]
    %v60 = vld [vmem:[#allocation2 + $0x8] sm:$0xf]
    %v61 = vld [vmem:[#allocation2 + $0xc] sm:$0xf]
    %v62 = vld [vmem:[#allocation2 + $0x10] sm:$0xf]
    %v63 = vld [vmem:[#allocation2 + $0x14] sm:$0xf]
    %v64 = vld [vmem:[#allocation2 + $0x18] sm:$0xf]
    %v65 = vld [vmem:[#allocation2 + $0x1c] sm:$0xf]
    %v66 = vld [vmem:[#allocation2 + $0x20] sm:$0xf]
    %v67 = vld [vmem:[#allocation2 + $0x24] sm:$0xf]
    %v68 = vld [vmem:[#allocation2 + $0x28] sm:$0xf]
    %v69 = vld [vmem:[#allocation2 + $0x2c] sm:$0xf]
    %v70 = vld [vmem:[#allocation2 + $0x30] sm:$0xf]
    %v71 = vld [vmem:[#allocation2 + $0x34] sm:$0xf]
    %v72 = vld [vmem:[#allocation2 + $0x38] sm:$0xf]
    %v73 = vld [vmem:[#allocation2 + $0x3c] sm:$0xf]
    %v74 = vld [vmem:[#allocation2 + $0x40] sm:$0xf]
    %v75 = vld [vmem:[#allocation2 + $0x44] sm:$0xf]
    %v76 = vld [vmem:[#allocation2 + $0x48] sm:$0xf]
    %v77 = vld [vmem:[#allocation2 + $0x4c] sm:$0xf]
    %v78 = vld [vmem:[#allocation2 + $0x50] sm:$0xf]
    %v79 = vld [vmem:[#allocation2 + $0x54] sm:$0xf]
    %v80 = vld [vmem:[#allocation2 + $0x58] sm:$0xf]
    %v81 = vld [vmem:[#allocation2 + $0x5c] sm:$0xf]
    %v82 = vld [vmem:[#allocation2 + $0x60] sm:$0xf]
    %v83 = vld [vmem:[#allocation2 + $0x64] sm:$0xf]
    %v84 = vld [vmem:[#allocation2 + $0x68] sm:$0xf]
    %v85 = vld [vmem:[#allocation2 + $0x6c] sm:$0xf]
    %v86 = vld [vmem:[#allocation2 + $0x70] sm:$0xf]
    %v87 = vld [vmem:[#allocation2 + $0x74] sm:$0xf]
    %v88 = vld [vmem:[#allocation2 + $0x78] sm:$0xf]
    %v89 = vld [vmem:[#allocation2 + $0x7c] sm:$0xf]
    %v90 = vld [vmem:[#allocation2 + $0x80] sm:$0xf]
    %v91 = vld [vmem:[#allocation2 + $0x84] sm:$0xf]
    %v92 = vld [vmem:[#allocation2 + $0x88] sm:$0xf]
    %v93 = vld [vmem:[#allocation2 + $0x8c] sm:$0xf]
    %v94 = vld [vmem:[#allocation2 + $0x90] sm:$0xf]
    %v95 = vld [vmem:[#allocation2 + $0x94] sm:$0xf]
    %v96 = vld [vmem:[#allocation2 + $0x98] sm:$0xf]
    %v97 = vld [vmem:[#allocation2 + $0x9c] sm:$0xf]
    %v98 = vld [vmem:[#allocation2 + $0xa0] sm:$0xf]
    %v99 = vld [vmem:[#allocation2 + $0xa4] sm:$0xf]
    %v100 = vld [vmem:[#allocation2 + $0xa8] sm:$0xf]
    %v101 = vld [vmem:[#allocation2 + $0xac] sm:$0xf]
    %v102 = vld [vmem:[#allocation2 + $0xb0] sm:$0xf]
    %v103 = vld [vmem:[#allocation2 + $0xb4] sm:$0xf]
    %v104 = vld [vmem:[#allocation2 + $0xb8] sm:$0xf]
    %v105 = vld [vmem:[#allocation2 + $0xbc] sm:$0xf]
    %v106 = vld [vmem:[#allocation2 + $0xc0] sm:$0xf]
    %v107 = vld [vmem:[#allocation2 + $0xc4] sm:$0xf]
    %v108 = vld [vmem:[#allocation2 + $0xc8] sm:$0xf]
    %v109 = vld [vmem:[#allocation2 + $0xcc] sm:$0xf]
    %v110 = vld [vmem:[#allocation2 + $0xd0] sm:$0xf]
    %v111 = vld [vmem:[#allocation2 + $0xd4] sm:$0xf]
    %v112 = vld [vmem:[#allocation2 + $0xd8] sm:$0xf]
    %v113 = vld [vmem:[#allocation2 + $0xdc] sm:$0xf]
    %v114 = vld [vmem:[#allocation2 + $0xe0] sm:$0xf]
    %v115 = vld [vmem:[#allocation2 + $0xe4] sm:$0xf]
    %v116 = vld [vmem:[#allocation2 + $0xe8] sm:$0xf]
    %v117 = vld [vmem:[#allocation2 + $0xec] sm:$0xf]
    %v118 = vld [vmem:[#allocation2 + $0xf0] sm:$0xf]
    %v119 = vld [vmem:[#allocation2 + $0xf4] sm:$0xf]
    %v120 = vld [vmem:[#allocation2 + $0xf8] sm:$0xf]
    %v121 = vld [vmem:[#allocation2 + $0xfc] sm:$0xf]
    %v122 = vld [vmem:[#allocation2 + $0x100] sm:$0xf]
    %v123 = vld [vmem:[#allocation2 + $0x104] sm:$0xf]
    %v124 = vld [vmem:[#allocation2 + $0x108] sm:$0xf]
    %v125 = vld [vmem:[#allocation2 + $0x10c] sm:$0xf]
    %v126 = vld [vmem:[#allocation2 + $0x110] sm:$0xf]
    %v127 = vld [vmem:[#allocation2 + $0x114] sm:$0xf]
    %v128 = vld [vmem:[#allocation2 + $0x118] sm:$0xf]
    %v129 = vld [vmem:[#allocation2 + $0x11c] sm:$0xf]
    %v130 = vld [vmem:[#allocation2 + $0x120] sm:$0xf]
    %v131 = vld [vmem:[#allocation2 + $0x124] sm:$0xf]
    %v132 = vld [vmem:[#allocation2 + $0x128] sm:$0xf]
    %v133 = vld [vmem:[#allocation2 + $0x12c] sm:$0xf]
    %v134 = vld [vmem:[#allocation2 + $0x130] sm:$0xf]
    %v135 = vld [vmem:[#allocation2 + $0x134] sm:$0xf]
    %v136 = vld [vmem:[#allocation2 + $0x138] sm:$0xf]
    %v137 = vld [vmem:[#allocation2 + $0x13c] sm:$0xf]
    %v138 = vld [vmem:[#allocation2 + $0x140] sm:$0xf]
    %v139 = vld [vmem:[#allocation2 + $0x144] sm:$0xf]
    %v140 = vld [vmem:[#allocation2 + $0x148] sm:$0xf]
    %v141 = vld [vmem:[#allocation2 + $0x14c] sm:$0xf]
    %v142 = vld [vmem:[#allocation2 + $0x150] sm:$0xf]
    %v143 = vld [vmem:[#allocation2 + $0x154] sm:$0xf]
    %v144 = vld [vmem:[#allocation2 + $0x158] sm:$0xf]
    %v145 = vld [vmem:[#allocation2 + $0x15c] sm:$0xf]
    %v146 = vld [vmem:[#allocation2 + $0x160] sm:$0xf]
    %v147 = vld [vmem:[#allocation2 + $0x164] sm:$0xf]
    %v148 = vld [vmem:[#allocation2 + $0x168] sm:$0xf]
    %v149 = vld [vmem:[#allocation2 + $0x16c] sm:$0xf]
    %v150 = vld [vmem:[#allocation2 + $0x170] sm:$0xf]
    %v151 = vld [vmem:[#allocation2 + $0x174] sm:$0xf]
    %v152 = vld [vmem:[#allocation2 + $0x178] sm:$0xf]
    %v153 = vld [vmem:[#allocation2 + $0x17c] sm:$0xf]
    %v154 = vld [vmem:[#allocation2 + $0x180] sm:$0xf]
    %v155 = vld [vmem:[#allocation2 + $0x184] sm:$0xf]
    %v156 = vld [vmem:[#allocation2 + $0x188] sm:$0xf]
    %v157 = vld [vmem:[#allocation2 + $0x18c] sm:$0xf]
    %v158 = vld [vmem:[#allocation2 + $0x190] sm:$0xf]
    %v159 = vld [vmem:[#allocation2 + $0x194] sm:$0xf]
    %v160 = vld [vmem:[#allocation2 + $0x198] sm:$0xf]
    %v161 = vld [vmem:[#allocation2 + $0x19c] sm:$0xf]
    %v162 = vld [vmem:[#allocation2 + $0x1a0] sm:$0xf]
    %v163 = vld [vmem:[#allocation2 + $0x1a4] sm:$0xf]
    %v164 = vld [vmem:[#allocation2 + $0x1a8] sm:$0xf]
    %v165 = vld [vmem:[#allocation2 + $0x1ac] sm:$0xf]
    %v166 = vld [vmem:[#allocation2 + $0x1b0] sm:$0xf]
    %v167 = vld [vmem:[#allocation2 + $0x1b4] sm:$0xf]
    %v168 = vld [vmem:[#allocation2 + $0x1b8] sm:$0xf]
    %v169 = vld [vmem:[#allocation2 + $0x1bc] sm:$0xf]
    %v170 = vld [vmem:[#allocation2 + $0x1c0] sm:$0xf]
    %v171 = vld [vmem:[#allocation2 + $0x1c4] sm:$0xf]
    %v172 = vld [vmem:[#allocation2 + $0x1c8] sm:$0xf]
    %v173 = vld [vmem:[#allocation2 + $0x1cc] sm:$0xf]
    %v174 = vld [vmem:[#allocation2 + $0x1d0] sm:$0xf]
    %v175 = vld [vmem:[#allocation2 + $0x1d4] sm:$0xf]
    %v176 = vld [vmem:[#allocation2 + $0x1d8] sm:$0xf]
    %v177 = vld [vmem:[#allocation2 + $0x1dc] sm:$0xf]
    %v178 = vld [vmem:[#allocation2 + $0x1e0] sm:$0xf]
    %v179 = vld [vmem:[#allocation2 + $0x1e4] sm:$0xf]
    %v180 = vld [vmem:[#allocation2 + $0x1e8] sm:$0xf]
    %v181 = vld [vmem:[#allocation2 + $0x1ec] sm:$0xf]
    %v182 = vld [vmem:[#allocation2 + $0x1f0] sm:$0xf]
    %v183 = vld [vmem:[#allocation2 + $0x1f4] sm:$0xf]
    %v184 = vld [vmem:[#allocation2 + $0x1f8] sm:$0xf]
    %v185 = vld [vmem:[#allocation2 + $0x1fc] sm:$0xf]
    %v314 = vunpack.c.l.b16 %v58
    %v315 = vunpack.c.l.b16 %v59
    %v316 = vunpack.c.l.b16 %v60
    %v317 = vunpack.c.l.b16 %v61
    %v318 = vunpack.c.l.b16 %v62
    %v319 = vunpack.c.l.b16 %v63
    %v320 = vunpack.c.l.b16 %v64
    %v321 = vunpack.c.l.b16 %v65
    %v322 = vunpack.c.l.b16 %v66
    %v323 = vunpack.c.l.b16 %v67
    %v324 = vunpack.c.l.b16 %v68
    %v325 = vunpack.c.l.b16 %v69
    %v326 = vunpack.c.l.b16 %v70
    %v327 = vunpack.c.l.b16 %v71
    %v328 = vunpack.c.l.b16 %v72
    %v329 = vunpack.c.l.b16 %v73
    %v330 = vunpack.c.l.b16 %v74
    %v331 = vunpack.c.l.b16 %v75
    %v332 = vunpack.c.l.b16 %v76
    %v333 = vunpack.c.l.b16 %v77
    %v334 = vunpack.c.l.b16 %v78
    %v335 = vunpack.c.l.b16 %v79
    %v336 = vunpack.c.l.b16 %v80
    %v337 = vunpack.c.l.b16 %v81
    %v338 = vunpack.c.l.b16 %v82
    %v339 = vunpack.c.l.b16 %v83
    %v340 = vunpack.c.l.b16 %v84
    %v341 = vunpack.c.l.b16 %v85
    %v342 = vunpack.c.l.b16 %v86
    %v343 = vunpack.c.l.b16 %v87
    %v344 = vunpack.c.l.b16 %v88
    %v345 = vunpack.c.l.b16 %v89
    %v346 = vunpack.c.l.b16 %v90
    %v347 = vunpack.c.l.b16 %v91
    %v348 = vunpack.c.l.b16 %v92
    %v349 = vunpack.c.l.b16 %v93
    %v350 = vunpack.c.l.b16 %v94
    %v351 = vunpack.c.l.b16 %v95
    %v352 = vunpack.c.l.b16 %v96
    %v353 = vunpack.c.l.b16 %v97
    %v354 = vunpack.c.l.b16 %v98
    %v355 = vunpack.c.l.b16 %v99
    %v356 = vunpack.c.l.b16 %v100
    %v357 = vunpack.c.l.b16 %v101
    %v358 = vunpack.c.l.b16 %v102
    %v359 = vunpack.c.l.b16 %v103
    %v360 = vunpack.c.l.b16 %v104
    %v361 = vunpack.c.l.b16 %v105
    %v362 = vunpack.c.l.b16 %v106
    %v363 = vunpack.c.l.b16 %v107
    %v364 = vunpack.c.l.b16 %v108
    %v365 = vunpack.c.l.b16 %v109
    %v366 = vunpack.c.l.b16 %v110
    %v367 = vunpack.c.l.b16 %v111
    %v368 = vunpack.c.l.b16 %v112
    %v369 = vunpack.c.l.b16 %v113
    %v370 = vunpack.c.l.b16 %v114
    %v371 = vunpack.c.l.b16 %v115
    %v372 = vunpack.c.l.b16 %v116
    %v373 = vunpack.c.l.b16 %v117
    %v374 = vunpack.c.l.b16 %v118
    %v375 = vunpack.c.l.b16 %v119
    %v376 = vunpack.c.l.b16 %v120
    %v377 = vunpack.c.l.b16 %v121
    %v378 = vunpack.c.l.b16 %v122
    %v379 = vunpack.c.l.b16 %v123
    %v380 = vunpack.c.l.b16 %v124
    %v381 = vunpack.c.l.b16 %v125
    %v382 = vunpack.c.l.b16 %v126
    %v383 = vunpack.c.l.b16 %v127
    %v384 = vunpack.c.l.b16 %v128
    %v385 = vunpack.c.l.b16 %v129
    %v386 = vunpack.c.l.b16 %v130
    %v387 = vunpack.c.l.b16 %v131
    %v388 = vunpack.c.l.b16 %v132
    %v389 = vunpack.c.l.b16 %v133
    %v390 = vunpack.c.l.b16 %v134
    %v391 = vunpack.c.l.b16 %v135
    %v392 = vunpack.c.l.b16 %v136
    %v393 = vunpack.c.l.b16 %v137
    %v394 = vunpack.c.l.b16 %v138
    %v395 = vunpack.c.l.b16 %v139
    %v396 = vunpack.c.l.b16 %v140
    %v397 = vunpack.c.l.b16 %v141
    %v398 = vunpack.c.l.b16 %v142
    %v399 = vunpack.c.l.b16 %v143
    %v400 = vunpack.c.l.b16 %v144
    %v401 = vunpack.c.l.b16 %v145
    %v402 = vunpack.c.l.b16 %v146
    %v403 = vunpack.c.l.b16 %v147
    %v404 = vunpack.c.l.b16 %v148
    %v405 = vunpack.c.l.b16 %v149
    %v406 = vunpack.c.l.b16 %v150
    %v407 = vunpack.c.l.b16 %v151
    %v408 = vunpack.c.l.b16 %v152
    %v409 = vunpack.c.l.b16 %v153
    %v410 = vunpack.c.l.b16 %v154
    %v411 = vunpack.c.l.b16 %v155
    %v412 = vunpack.c.l.b16 %v156
    %v413 = vunpack.c.l.b16 %v157
    %v414 = vunpack.c.l.b16 %v158
    %v415 = vunpack.c.l.b16 %v159
    %v416 = vunpack.c.l.b16 %v160
    %v417 = vunpack.c.l.b16 %v161
    %v418 = vunpack.c.l.b16 %v162
    %v419 = vunpack.c.l.b16 %v163
    %v420 = vunpack.c.l.b16 %v164
    %v421 = vunpack.c.l.b16 %v165
    %v422 = vunpack.c.l.b16 %v166
    %v423 = vunpack.c.l.b16 %v167
    %v424 = vunpack.c.l.b16 %v168
    %v425 = vunpack.c.l.b16 %v169
    %v426 = vunpack.c.l.b16 %v170
    %v427 = vunpack.c.l.b16 %v171
    %v428 = vunpack.c.l.b16 %v172
    %v429 = vunpack.c.l.b16 %v173
    %v430 = vunpack.c.l.b16 %v174
    %v431 = vunpack.c.l.b16 %v175
    %v432 = vunpack.c.l.b16 %v176
    %v433 = vunpack.c.l.b16 %v177
    %v434 = vunpack.c.l.b16 %v178
    %v435 = vunpack.c.l.b16 %v179
    %v436 = vunpack.c.l.b16 %v180
    %v437 = vunpack.c.l.b16 %v181
    %v438 = vunpack.c.l.b16 %v182
    %v439 = vunpack.c.l.b16 %v183
    %v440 = vunpack.c.l.b16 %v184
    %v441 = vunpack.c.l.b16 %v185
    %v442 = vpack.c.b16 %v315, %v314
    %v443 = vpack.c.b16 %v317, %v316
    %v444 = vpack.c.b16 %v319, %v318
    %v445 = vpack.c.b16 %v321, %v320
    %v446 = vpack.c.b16 %v323, %v322
    %v447 = vpack.c.b16 %v325, %v324
    %v448 = vpack.c.b16 %v327, %v326
    %v449 = vpack.c.b16 %v329, %v328
    %v450 = vpack.c.b16 %v331, %v330
    %v451 = vpack.c.b16 %v333, %v332
    %v452 = vpack.c.b16 %v335, %v334
    %v453 = vpack.c.b16 %v337, %v336
    %v454 = vpack.c.b16 %v339, %v338
    %v455 = vpack.c.b16 %v341, %v340
    %v456 = vpack.c.b16 %v343, %v342
    %v457 = vpack.c.b16 %v345, %v344
    %v458 = vpack.c.b16 %v347, %v346
    %v459 = vpack.c.b16 %v349, %v348
    %v460 = vpack.c.b16 %v351, %v350
    %v461 = vpack.c.b16 %v353, %v352
    %v462 = vpack.c.b16 %v355, %v354
    %v463 = vpack.c.b16 %v357, %v356
    %v464 = vpack.c.b16 %v359, %v358
    %v465 = vpack.c.b16 %v361, %v360
    %v466 = vpack.c.b16 %v363, %v362
    %v467 = vpack.c.b16 %v365, %v364
    %v468 = vpack.c.b16 %v367, %v366
    %v469 = vpack.c.b16 %v369, %v368
    %v470 = vpack.c.b16 %v371, %v370
    %v471 = vpack.c.b16 %v373, %v372
    %v472 = vpack.c.b16 %v375, %v374
    %v473 = vpack.c.b16 %v377, %v376
    %v474 = vpack.c.b16 %v379, %v378
    %v475 = vpack.c.b16 %v381, %v380
    %v476 = vpack.c.b16 %v383, %v382
    %v477 = vpack.c.b16 %v385, %v384
    %v478 = vpack.c.b16 %v387, %v386
    %v479 = vpack.c.b16 %v389, %v388
    %v480 = vpack.c.b16 %v391, %v390
    %v481 = vpack.c.b16 %v393, %v392
    %v482 = vpack.c.b16 %v395, %v394
    %v483 = vpack.c.b16 %v397, %v396
    %v484 = vpack.c.b16 %v399, %v398
    %v485 = vpack.c.b16 %v401, %v400
    %v486 = vpack.c.b16 %v403, %v402
    %v487 = vpack.c.b16 %v405, %v404
    %v488 = vpack.c.b16 %v407, %v406
    %v489 = vpack.c.b16 %v409, %v408
    %v490 = vpack.c.b16 %v411, %v410
    %v491 = vpack.c.b16 %v413, %v412
    %v492 = vpack.c.b16 %v415, %v414
    %v493 = vpack.c.b16 %v417, %v416
    %v494 = vpack.c.b16 %v419, %v418
    %v495 = vpack.c.b16 %v421, %v420
    %v496 = vpack.c.b16 %v423, %v422
    %v497 = vpack.c.b16 %v425, %v424
    %v498 = vpack.c.b16 %v427, %v426
    %v499 = vpack.c.b16 %v429, %v428
    %v500 = vpack.c.b16 %v431, %v430
    %v501 = vpack.c.b16 %v433, %v432
    %v502 = vpack.c.b16 %v435, %v434
    %v503 = vpack.c.b16 %v437, %v436
    %v504 = vpack.c.b16 %v439, %v438
    %v505 = vpack.c.b16 %v441, %v440
    %570 = vmatprep.subr.bf16.mxu0 0
    %571 = vmatpush1.bf16.msra.mxu0 %v442
    %572 = vmatprep.subr.bf16.mxu0 0
    %573 = vmatpush1.bf16.msra.mxu0 %v443
    %574 = vmatprep.subr.bf16.mxu0 0
    %575 = vmatpush1.bf16.msra.mxu0 %v444
    %576 = vmatprep.subr.bf16.mxu0 0
    %577 = vmatpush1.bf16.msra.mxu0 %v445
    %578 = vmatprep.subr.bf16.mxu0 0
    %579 = vmatpush1.bf16.msra.mxu0 %v446
    %580 = vmatprep.subr.bf16.mxu0 0
    %581 = vmatpush1.bf16.msra.mxu0 %v447
    %582 = vmatprep.subr.bf16.mxu0 0
    %583 = vmatpush1.bf16.msra.mxu0 %v448
    %584 = vmatprep.subr.bf16.mxu0 0
    %585 = vmatpush1.bf16.msra.mxu0 %v449
    %586 = vmatprep.subr.bf16.mxu0 0
    %587 = vmatpush1.bf16.msra.mxu0 %v450
    %588 = vmatprep.subr.bf16.mxu0 0
    %589 = vmatpush1.bf16.msra.mxu0 %v451
    %590 = vmatprep.subr.bf16.mxu0 0
    %591 = vmatpush1.bf16.msra.mxu0 %v452
    %592 = vmatprep.subr.bf16.mxu0 0
    %593 = vmatpush1.bf16.msra.mxu0 %v453
    %594 = vmatprep.subr.bf16.mxu0 0
    %595 = vmatpush1.bf16.msra.mxu0 %v454
    %596 = vmatprep.subr.bf16.mxu0 0
    %597 = vmatpush1.bf16.msra.mxu0 %v455
    %598 = vmatprep.subr.bf16.mxu0 0
    %599 = vmatpush1.bf16.msra.mxu0 %v456
    %600 = vmatprep.subr.bf16.mxu0 0
    %601 = vmatpush1.bf16.msra.mxu0 %v457
    %602 = vmatprep.mubr.bf16.mxu0 %v49
    %603 = vmatmul.mubr.bf16.gmra.mrb[0].mxu0 %v48
    %v604 = vpop.f32.mrb[0].mxu0
    %v605 = vadd.f32 0.0, %v604
    %v606 = vpop.f32.mrb[0].mxu0
    %v607 = vpop.f32.mrb[0].mxu0
    %v608 = vadd.f32 0.0, %v607
    %v609 = vpop.f32.mrb[0].mxu0
    %610 = vdwg.mxu0
    %611 = vmatprep.subr.bf16.mxu0 0
    %612 = vmatpush1.bf16.msra.mxu0 %v458
    %613 = vmatprep.subr.bf16.mxu0 0
    %614 = vmatpush1.bf16.msra.mxu0 %v459
    %615 = vmatprep.subr.bf16.mxu0 0
    %616 = vmatpush1.bf16.msra.mxu0 %v460
    %617 = vmatprep.subr.bf16.mxu0 0
    %618 = vmatpush1.bf16.msra.mxu0 %v461
    %619 = vmatprep.subr.bf16.mxu0 0
    %620 = vmatpush1.bf16.msra.mxu0 %v462
    %621 = vmatprep.subr.bf16.mxu0 0
    %622 = vmatpush1.bf16.msra.mxu0 %v463
    %623 = vmatprep.subr.bf16.mxu0 0
    %624 = vmatpush1.bf16.msra.mxu0 %v464
    %625 = vmatprep.subr.bf16.mxu0 0
    %626 = vmatpush1.bf16.msra.mxu0 %v465
    %627 = vmatprep.subr.bf16.mxu0 0
    %628 = vmatpush1.bf16.msra.mxu0 %v466
    %629 = vmatprep.subr.bf16.mxu0 0
    %630 = vmatpush1.bf16.msra.mxu0 %v467
    %631 = vmatprep.subr.bf16.mxu0 0
    %632 = vmatpush1.bf16.msra.mxu0 %v468
    %633 = vmatprep.subr.bf16.mxu0 0
    %634 = vmatpush1.bf16.msra.mxu0 %v469
    %635 = vmatprep.subr.bf16.mxu0 0
    %636 = vmatpush1.bf16.msra.mxu0 %v470
    %637 = vmatprep.subr.bf16.mxu0 0
    %638 = vmatpush1.bf16.msra.mxu0 %v471
    %639 = vmatprep.subr.bf16.mxu0 0
    %640 = vmatpush1.bf16.msra.mxu0 %v472
    %641 = vmatprep.subr.bf16.mxu0 0
    %642 = vmatpush1.bf16.msra.mxu0 %v473
    %643 = vmatprep.mubr.bf16.mxu0 %v51
    %644 = vmatmul.mubr.bf16.gmra.mrb[0].mxu0 %v50
    %v645 = vpop.f32.mrb[0].mxu0
    %v646 = vadd.f32 %v605, %v645
    %v647 = vpop.f32.mrb[0].mxu0
    %v648 = vpop.f32.mrb[0].mxu0
    %v649 = vadd.f32 %v608, %v648
    %v650 = vpop.f32.mrb[0].mxu0
    %651 = vdwg.mxu0
    %652 = vmatprep.subr.bf16.mxu0 0
    %653 = vmatpush1.bf16.msra.mxu0 %v474
    %654 = vmatprep.subr.bf16.mxu0 0
    %655 = vmatpush1.bf16.msra.mxu0 %v475
    %656 = vmatprep.subr.bf16.mxu0 0
    %657 = vmatpush1.bf16.msra.mxu0 %v476
    %658 = vmatprep.subr.bf16.mxu0 0
    %659 = vmatpush1.bf16.msra.mxu0 %v477
    %660 = vmatprep.subr.bf16.mxu0 0
    %661 = vmatpush1.bf16.msra.mxu0 %v478
    %662 = vmatprep.subr.bf16.mxu0 0
    %663 = vmatpush1.bf16.msra.mxu0 %v479
    %664 = vmatprep.subr.bf16.mxu0 0
    %665 = vmatpush1.bf16.msra.mxu0 %v480
    %666 = vmatprep.subr.bf16.mxu0 0
    %667 = vmatpush1.bf16.msra.mxu0 %v481
    %668 = vmatprep.subr.bf16.mxu0 0
    %669 = vmatpush1.bf16.msra.mxu0 %v482
    %670 = vmatprep.subr.bf16.mxu0 0
    %671 = vmatpush1.bf16.msra.mxu0 %v483
    %672 = vmatprep.subr.bf16.mxu0 0
    %673 = vmatpush1.bf16.msra.mxu0 %v484
    %674 = vmatprep.subr.bf16.mxu0 0
    %675 = vmatpush1.bf16.msra.mxu0 %v485
    %676 = vmatprep.subr.bf16.mxu0 0
    %677 = vmatpush1.bf16.msra.mxu0 %v486
    %678 = vmatprep.subr.bf16.mxu0 0
    %679 = vmatpush1.bf16.msra.mxu0 %v487
    %680 = vmatprep.subr.bf16.mxu0 0
    %681 = vmatpush1.bf16.msra.mxu0 %v488
    %682 = vmatprep.subr.bf16.mxu0 0
    %683 = vmatpush1.bf16.msra.mxu0 %v489
    %684 = vmatprep.mubr.bf16.mxu0 %v53
    %685 = vmatmul.mubr.bf16.gmra.mrb[0].mxu0 %v52
    %v686 = vpop.f32.mrb[0].mxu0
    %v687 = vadd.f32 %v646, %v686
    %v688 = vpop.f32.mrb[0].mxu0
    %v689 = vpop.f32.mrb[0].mxu0
    %v690 = vadd.f32 %v649, %v689
    %v691 = vpop.f32.mrb[0].mxu0
    %692 = vdwg.mxu0
    %693 = vmatprep.subr.bf16.mxu0 0
    %694 = vmatpush1.bf16.msra.mxu0 %v490
    %695 = vmatprep.subr.bf16.mxu0 0
    %696 = vmatpush1.bf16.msra.mxu0 %v491
    %697 = vmatprep.subr.bf16.mxu0 0
    %698 = vmatpush1.bf16.msra.mxu0 %v492
    %699 = vmatprep.subr.bf16.mxu0 0
    %700 = vmatpush1.bf16.msra.mxu0 %v493
    %701 = vmatprep.subr.bf16.mxu0 0
    %702 = vmatpush1.bf16.msra.mxu0 %v494
    %703 = vmatprep.subr.bf16.mxu0 0
    %704 = vmatpush1.bf16.msra.mxu0 %v495
    %705 = vmatprep.subr.bf16.mxu0 0
    %706 = vmatpush1.bf16.msra.mxu0 %v496
    %707 = vmatprep.subr.bf16.mxu0 0
    %708 = vmatpush1.bf16.msra.mxu0 %v497
    %709 = vmatprep.subr.bf16.mxu0 0
    %710 = vmatpush1.bf16.msra.mxu0 %v498
    %711 = vmatprep.subr.bf16.mxu0 0
    %712 = vmatpush1.bf16.msra.mxu0 %v499
    %713 = vmatprep.subr.bf16.mxu0 0
    %714 = vmatpush1.bf16.msra.mxu0 %v500
    %715 = vmatprep.subr.bf16.mxu0 0
    %716 = vmatpush1.bf16.msra.mxu0 %v501
    %717 = vmatprep.subr.bf16.mxu0 0
    %718 = vmatpush1.bf16.msra.mxu0 %v502
    %719 = vmatprep.subr.bf16.mxu0 0
    %720 = vmatpush1.bf16.msra.mxu0 %v503
    %721 = vmatprep.subr.bf16.mxu0 0
    %722 = vmatpush1.bf16.msra.mxu0 %v504
    %723 = vmatprep.subr.bf16.mxu0 0
    %724 = vmatpush1.bf16.msra.mxu0 %v505
    %725 = vmatprep.mubr.bf16.mxu0 %v55
    %726 = vmatmul.mubr.bf16.gmra.mrb[0].mxu0 %v54
    %v727 = vpop.f32.mrb[0].mxu0
    %v728 = vadd.f32 %v687, %v727
    %v729 = vpop.f32.mrb[0].mxu0
    %v730 = vpop.f32.mrb[0].mxu0
    %v731 = vadd.f32 %v690, %v730
    %v732 = vpop.f32.mrb[0].mxu0
    %733 = vdwg.mxu0
    %v734 = vadd.f32 %v56, %v728
    %v735 = vadd.f32 %v57, %v731
    %736 = vst [vmem:[%s2] sm:$0xff] %v734
    %737 = vst [vmem:[%s2 + $0x8] sm:$0xff] %v735
    // Predicated region
    $region18: #{_forward.1} parent=1 // pred_check
      %p738 = pneg %p26
    $region19: #{_forward.1} parent=1 // pred_check_branch
      %740 = sbr.rel (%p738) target = $region21
    $region20: #{_forward.1} parent=1 // pred_region
      %v741 = vld [vmem:[%s2] sm:$0xff]
      %v742 = vld [vmem:[%s2 + $0x8] sm:$0xff]
      %v743 = vmul.f32 %v741, %v741
      %v744 = vmul.f32 %v742, %v742
      %745 = vadd.xlane.f32.xlu0 %v743
      %v746 = vpop.xlane.xlu0 %745
      %747 = vadd.xlane.f32.xlu0 %v744
      %v748 = vpop.xlane.xlu0 %747
      %v749 = vmax.f32 %v746, 1e-24
      %v750 = vmax.f32 %v748, 1e-24
      %v751 = vrsqrt.pop %v749
      %v752 = vrsqrt.pop %v750
      %v753 = vmul.f32 %v741, %v751
      %v754 = vmul.f32 %v742, %v752
      %755 = vst [vmem:[%s2] sm:$0xff] %v753
      %756 = vst [vmem:[%s2 + $0x8] sm:$0xff] %v754
    $region21: #{_forward.1} parent=1 // pred_fallthru
      _
    // Predicated region
    $region22: #{_forward.1} parent=1 // pred_check
      _
    $region23: #{_forward.1} parent=1 // pred_check_branch
      %758 = sbr.rel (0) target = $region25
    $region24: #{_forward.1} parent=1 // pred_region
      _
    $region25: #{_forward.1} parent=1 // pred_fallthru
      _
    // Predicated region
    $region26: #{_forward.1} parent=1 // pred_check
      _
    $region27: #{_forward.1} parent=1 // pred_check_branch
      %760 = sbr.rel (0) target = $region29
    $region28: #{_forward.1} parent=1 // pred_region
      _
    $region29: #{_forward.1} parent=1 // pred_fallthru
      _
    %761 = vsyncpa [#allocation3], 1

</llo_original>
